<compile_context>
chip_gen: v7x
topology: tpu7x:2x2x1
jax: 0.10.0
libtpu: 0.0.40
codegen_flags: <defaults>
</compile_context>

<pallas_src>
import jax
import jax.numpy as jnp
from jax.experimental import pallas as pl
from jax.experimental.pallas import tpu as pltpu

HIDDEN = 100        # logical hidden size of the PyTorch module
LANE = 128
SUBLANE = 8


def _round_up(x, m):
    return (x + m - 1) // m * m


# --------------------------------------------------------------------------
# Kernel: one fused GEMM  y = x @ W + b
# --------------------------------------------------------------------------
def _generator_kernel(x_ref, w_ref, b_ref, o_ref):
    y = jnp.dot(x_ref[...], w_ref[...], preferred_element_type=jnp.float32)
    y = y + b_ref[...]                       # bias add in f32 on the VPU
    o_ref[...] = y.astype(o_ref.dtype)


# --------------------------------------------------------------------------
# Host-side parameter folding (done once per parameter set, outside the kernel)
# --------------------------------------------------------------------------
def fold_generator_params(w1, b1, w2, b2):
    """Fold Linear(num_inputs,100) -> Linear(100,num_outputs) into one affine map.

    Valid because the module's forward applies no nonlinearity between layers:
        y = (x @ W1 + b1) @ W2 + b2 = x @ (W1 @ W2) + (b1 @ W2 + b2)

    w1: [num_inputs, hidden]   b1: [hidden] or [1, hidden]
    w2: [hidden, num_outputs]  b2: [num_outputs] or [1, num_outputs]
    Returns W: [num_inputs, num_outputs], b: [1, num_outputs] (f32).
    """
    b1 = b1.reshape(1, -1).astype(jnp.float32)
    b2 = b2.reshape(1, -1).astype(jnp.float32)
    w1 = w1.astype(jnp.float32)
    w2 = w2.astype(jnp.float32)
    w = jnp.dot(w1, w2)
    b = jnp.dot(b1, w2) + b2
    return w, b


# --------------------------------------------------------------------------
# VMEM budget / tile selection (generation-aware, with a safe fallback)
# --------------------------------------------------------------------------
def _vmem_budget_bytes():
    try:
        info = pltpu.get_tpu_info()
        cap = getattr(info, "vmem_capacity_bytes", None)
        if cap:
            # ~25% headroom for compiler scratch / I/O buffers:
            #   v7x (64 MiB)      -> ~48 MiB
            #   v5e/v6e (128 MiB) -> capped at ~100 MiB
            return int(min(cap * 3 // 4, 100 << 20))
    except Exception:
        pass
    return 48 << 20   # safe on v5e / v6e / v7x


def _vmem_limit_bytes(tile_b, num_inputs, num_outputs, itemsize, budget):
    x_tile = tile_b * num_inputs * itemsize
    out_tile = tile_b * num_outputs * itemsize
    weights = (num_inputs * num_outputs + num_outputs) * itemsize
    # 2 buffers per pipelined operand + headroom for compiler scratch.
    total = 2 * (x_tile + out_tile + weights) + (4 << 20)
    return int(min(max(total, 8 << 20), budget))


def _pick_tile_b(num_inputs, num_outputs, itemsize, budget):
    # Rows such that double-buffered x + out tiles stay well inside the budget.
    per_row = 2 * (num_inputs + num_outputs) * itemsize
    rows = (budget // 2) // max(per_row, 1)
    rows = min(1024, rows)                       # 512-1024 row sweet spot
    if rows >= LANE:
        rows = (rows // LANE) * LANE             # multiple of 128 (v5e MXU)
    else:
        rows = max(SUBLANE, (rows // SUBLANE) * SUBLANE)
    return int(rows)


# --------------------------------------------------------------------------
# Forward wrapper
# --------------------------------------------------------------------------
def generator_forward(x, w, b, *, tile_b=None, compute_dtype=None,
                      out_dtype=None):
    """x: [B, num_inputs]; (w, b) as returned by fold_generator_params.

    compute_dtype: optionally cast x / W to bf16 to halve HBM read traffic
    (accumulation and bias add remain f32)."""
    out_dtype = out_dtype or x.dtype
    if compute_dtype is not None:
        x = x.astype(compute_dtype)
        w = w.astype(compute_dtype)

    B, num_inputs = x.shape
    num_outputs = w.shape[1]
    itemsize = jnp.dtype(x.dtype).itemsize

    budget = _vmem_budget_bytes()
    if tile_b is None:
        tile_b = _pick_tile_b(num_inputs, num_outputs, itemsize, budget)

    # Batch tiling: pad the batch so every block is sublane-clean; tiny
    # batches collapse to a single padded tile.
    if B <= tile_b:
        b_pad = _round_up(B, SUBLANE)
        tile_eff = b_pad
    else:
        tile_eff = tile_b
        b_pad = _round_up(B, tile_eff)
    if b_pad != B:
        x = jnp.pad(x, ((0, b_pad - B), (0, 0)))
    n_tiles = b_pad // tile_eff

    resident = lambda a: pl.BlockSpec(a.shape, lambda i: (0, 0))

    cost = pl.CostEstimate(
        flops=2 * b_pad * num_inputs * num_outputs,
        transcendentals=0,
        bytes_accessed=(b_pad * num_inputs + b_pad * num_outputs) * itemsize
        + (num_inputs * num_outputs + num_outputs) * itemsize,
    )

    out = pl.pallas_call(
        _generator_kernel,
        out_shape=jax.ShapeDtypeStruct((b_pad, num_outputs), out_dtype),
        grid=(n_tiles,),
        in_specs=[
            pl.BlockSpec((tile_eff, num_inputs), lambda i: (i, 0)),  # x (tiled)
            resident(w),                                             # W stays
            resident(b),                                             # in VMEM
        ],
        # Full last-dim output block (no 128-lane padding, no wrapper slice).
        out_specs=pl.BlockSpec((tile_eff, num_outputs), lambda i: (i, 0)),
        compiler_params=pltpu.CompilerParams(
            dimension_semantics=("parallel",),   # v7x: shard batch over 2 TCs
            vmem_limit_bytes=_vmem_limit_bytes(
                tile_eff, num_inputs, num_outputs, itemsize, budget),
        ),
        cost_estimate=cost,
    )(x, w, b)

    return out[:B] if b_pad != B else out


# --------------------------------------------------------------------------
# Parameter init mimicking PyTorch nn.Linear default
# (uniform(-1/sqrt(fan_in), 1/sqrt(fan_in))); stored pre-transposed [in, out].
# --------------------------------------------------------------------------
def init_generator_params(key, num_inputs, num_outputs, hidden=HIDDEN,
                          dtype=jnp.float32):
    k1, k2, k3, k4 = jax.random.split(key, 4)
    bound1 = 1.0 / (num_inputs ** 0.5)
    bound2 = 1.0 / (hidden ** 0.5)
    w1 = jax.random.uniform(k1, (num_inputs, hidden), dtype, -bound1, bound1)
    b1 = jax.random.uniform(k2, (1, hidden), dtype, -bound1, bound1)
    w2 = jax.random.uniform(k3, (hidden, num_outputs), dtype, -bound2, bound2)
    b2 = jax.random.uniform(k4, (1, num_outputs), dtype, -bound2, bound2)
    return w1, b1, w2, b2


if __name__ == "__main__":
    key = jax.random.PRNGKey(0)
    k_x, k_x2, k_p = jax.random.split(key, 3)

    batch = 8
    num_inputs = 32
    num_outputs = 16

    # PyTorch-equivalent params, folded once into a single affine map.
    w1, b1, w2, b2 = init_generator_params(k_p, num_inputs, num_outputs)
    wf, bf = fold_generator_params(w1, b1, w2, b2)

    # --- small-batch check (single padded tile) ---
    x = jax.random.normal(k_x, (batch, num_inputs), dtype=jnp.float32)
    out = jax.block_until_ready(generator_forward(x, wf, bf))
    ref = (x @ w1 + b1) @ w2 + b2
    assert out.shape == (batch, num_outputs)
    assert jnp.allclose(out, ref, atol=1e-4, rtol=1e-4)

    # --- multi-tile check (exercises batch grid + batch padding path) ---
    batch2 = 260
    x2 = jax.random.normal(k_x2, (batch2, num_inputs), dtype=jnp.float32)
    out2 = jax.block_until_ready(generator_forward(x2, wf, bf, tile_b=128))
    ref2 = (x2 @ w1 + b1) @ w2 + b2
    assert out2.shape == (batch2, num_outputs)
    assert jnp.allclose(out2, ref2, atol=1e-4, rtol=1e-4)

    # --- optional bf16 compute path (halves x/W HBM read traffic) ---
    out3 = jax.block_until_ready(
        generator_forward(x, wf, bf, compute_dtype=jnp.bfloat16))
    assert out3.shape == (batch, num_outputs)
    assert jnp.allclose(out3.astype(jnp.float32), ref, atol=5e-2, rtol=5e-2)

    print("KERNEL_OK")
</pallas_src>

<mosaic_0001>
module attributes {stable_mosaic.version = 11 : i64} {
  func.func @_generator_kernel(%arg0: i32, %arg1: memref<8x32xf32, #tpu.memory_space<vmem>>, %arg2: memref<32x16xf32, #tpu.memory_space<vmem>>, %arg3: memref<1x16xf32, #tpu.memory_space<vmem>>, %arg4: memref<8x16xf32, #tpu.memory_space<vmem>>) attributes {dimension_semantics = [#tpu.dimension_semantics<parallel>], iteration_bounds = array<i64: 1>, scalar_prefetch = 0 : i64, scratch_operands = 0 : i64, tpu.core_type = #tpu.core_type<tc>, window_params = [{transform_indices = @transform_0, window_bounds = array<i64: 8, 32>}, {pipeline_mode = #tpu.pipeline_mode<synchronous>, transform_indices = @transform_1, window_bounds = array<i64: 32, 16>}, {pipeline_mode = #tpu.pipeline_mode<synchronous>, transform_indices = @transform_2, window_bounds = array<i64: 1, 16>}, {transform_indices = @transform_3, window_bounds = array<i64: 8, 16>}]} {
    %c0 = arith.constant 0 : index
    %c0_0 = arith.constant 0 : index
    %0 = vector.load %arg1[%c0, %c0_0] : memref<8x32xf32, #tpu.memory_space<vmem>>, vector<8x32xf32>
    %c0_1 = arith.constant 0 : index
    %c0_2 = arith.constant 0 : index
    %1 = vector.load %arg2[%c0_1, %c0_2] : memref<32x16xf32, #tpu.memory_space<vmem>>, vector<32x16xf32>
    %cst = arith.constant dense<0.000000e+00> : vector<8x16xf32>
    %2 = tpu.matmul %0, %1, %cst {dimension_numbers = #tpu.dot_dimension_numbers<[1], [0], [0], [1], [0, 0, 1, 1], [], []>} : vector<8x32xf32>, vector<32x16xf32>, vector<8x16xf32> -> vector<8x16xf32>
    %c0_3 = arith.constant 0 : index
    %c0_4 = arith.constant 0 : index
    %3 = vector.load %arg3[%c0_3, %c0_4] : memref<1x16xf32, #tpu.memory_space<vmem>>, vector<1x16xf32>
    %4 = vector.broadcast %3 : vector<1x16xf32> to vector<8x16xf32>
    %5 = arith.addf %2, %4 : vector<8x16xf32>
    %c0_5 = arith.constant 0 : index
    %c0_6 = arith.constant 0 : index
    %6 = vector.load %arg4[%c0_5, %c0_6] : memref<8x16xf32, #tpu.memory_space<vmem>>, vector<8x16xf32>
    tpu.vector_store %arg4[%c0_5, %c0_6], %5 {strides = array<i32>} : memref<8x16xf32, #tpu.memory_space<vmem>>, vector<8x16xf32>,
    return
  }
  func.func @transform_0(%arg0: i32) -> (i32, i32) {
    %c0_i32 = arith.constant 0 : i32
    %c0_i32_0 = arith.constant 0 : i32
    return %arg0, %c0_i32 : i32, i32
  }
  func.func @transform_1(%arg0: i32) -> (i32, i32) {
    %c0_i32 = arith.constant 0 : i32
    %c0_i32_0 = arith.constant 0 : i32
    %c0_i32_1 = arith.constant 0 : i32
    return %c0_i32, %c0_i32_0 : i32, i32
  }
  func.func @transform_2(%arg0: i32) -> (i32, i32) {
    %c0_i32 = arith.constant 0 : i32
    %c0_i32_0 = arith.constant 0 : i32
    %c0_i32_1 = arith.constant 0 : i32
    return %c0_i32, %c0_i32_0 : i32, i32
  }
  func.func @transform_3(%arg0: i32) -> (i32, i32) {
    %c0_i32 = arith.constant 0 : i32
    %c0_i32_0 = arith.constant 0 : i32
    return %arg0, %c0_i32 : i32, i32
  }
}

</mosaic_0001>

<llo_original>
// kernel: tpu_custom_call.1
$region0: #{tpu_custom_call.1}
  #allocation0 [shape = 'u32[]', space=smem, size = 0x4, offset = 0x4, fixed_abs, tag = 'smem constant byte address 0x4 - core index']
  #allocation1 [shape = 'u32[144,128]{1,0:T(1,128)}', space=vmem, size = 0x12000, scoped, tag = 'internal scratch']
  %s0 = inlined_call_operand.vmem [shape: f32[8,32], index: 0, kind: input, shape index: {}]
  %s1 = inlined_call_operand.vmem [shape: f32[32,16], index: 1, kind: input, shape index: {}]
  %s2 = inlined_call_operand.vmem [shape: f32[1,16], index: 2, kind: input, shape index: {}]
  %s3 = inlined_call_operand.hbm [shape: f32[8,16], index: 3, kind: output, shape index: {}]
  %s4 = sld [smem:[#allocation0]]
  $region22: #{tpu_custom_call.1} parent=0
    _
  %s6 = ssub.s32 1, %s4
  %s7 = scalar_select 0, %s6, %s4
  $region1: #{tpu_custom_call.1} parent=0
    #allocation2 [shape = 'u8[4096]{0}', space=vmem, size = 0x1000, scoped, tag = 'output window, operand 0, single buffered']
    #allocation3 [shape = 's32[1]{0}', space=sflag, size = 0x4, scoped, tag = 'scoped memory for tpu_custom_call.1']
    %8 = vsyncpa [#allocation3], 0
    // Predicated region
    $region2: #{tpu_custom_call.1} parent=1 // pred_check
      _
    $region3: #{tpu_custom_call.1} parent=1 // pred_check_branch
      %10 = sbr.rel (0) target = $region5
    $region4: #{tpu_custom_call.1} parent=1 // pred_region
      _
    $region5: #{tpu_custom_call.1} parent=1 // pred_fallthru
      _
    // Predicated region
    $region6: #{tpu_custom_call.1} parent=1 // pred_check
      _
    $region7: #{tpu_custom_call.1} parent=1 // pred_check_branch
      %12 = sbr.rel (0) target = $region9
    $region8: #{tpu_custom_call.1} parent=1 // pred_region
      _
    $region9: #{tpu_custom_call.1} parent=1 // pred_fallthru
      _
    // Predicated region
    $region10: #{tpu_custom_call.1} parent=1 // pred_check
      _
    $region11: #{tpu_custom_call.1} parent=1 // pred_check_branch
      %14 = sbr.rel (0) target = $region13
    $region12: #{tpu_custom_call.1} parent=1 // pred_region
      _
    $region13: #{tpu_custom_call.1} parent=1 // pred_fallthru
      _
    %v15 = vld [vmem:[%s0] sm:$0xff]
    %v16 = vld [vmem:[%s1] sm:$0xff]
    %v17 = vld [vmem:[%s1 + $0x8] sm:$0xff]
    %v18 = vld [vmem:[%s1 + $0x10] sm:$0xff]
    %v19 = vld [vmem:[%s1 + $0x18] sm:$0xff]
    %v20 = vld [vmem:[%s2] sm:$0x1]
    %v22 = vlaneseq
    %v23 = vshrl.u32 %v22, 7
    %v24 = vsub.s32 0, %v23
    %v25 = vrot.slane %v20, %v24
    %vm27 = vcmask 261120
    %v29 = vsel %vm27, %v15, 0
    %31 = vmatprep.subr.mxu0 0.0
    %32 = vmatpush1.msra.mxu0 %v16
    %33 = vmatprep.subr.mxu0 0.0
    %34 = vmatpush1.msra.mxu0 %v17
    %35 = vmatprep.subr.mxu0 0.0
    %36 = vmatpush1.msra.mxu0 %v18
    %37 = vmatprep.subr.mxu0 0.0
    %38 = vmatpush1.msra.mxu0 %v19
    %39 = vmatprep.subr.mxu0 0.0
    %40 = vmatpush1.msra.mxu0 0.0
    %41 = vmatprep.subr.mxu0 0.0
    %42 = vmatpush1.msra.mxu0 0.0
    %43 = vmatprep.subr.mxu0 0.0
    %44 = vmatpush1.msra.mxu0 0.0
    %45 = vmatprep.subr.mxu0 0.0
    %46 = vmatpush1.msra.mxu0 0.0
    %47 = vmatprep.subr.mxu0 0.0
    %48 = vmatpush1.msra.mxu0 0.0
    %49 = vmatprep.subr.mxu0 0.0
    %50 = vmatpush1.msra.mxu0 0.0
    %51 = vmatprep.subr.mxu0 0.0
    %52 = vmatpush1.msra.mxu0 0.0
    %53 = vmatprep.subr.mxu0 0.0
    %54 = vmatpush1.msra.mxu0 0.0
    %55 = vmatprep.subr.mxu0 0.0
    %56 = vmatpush1.msra.mxu0 0.0
    %57 = vmatprep.subr.mxu0 0.0
    %58 = vmatpush1.msra.mxu0 0.0
    %59 = vmatprep.subr.mxu0 0.0
    %60 = vmatpush1.msra.mxu0 0.0
    %61 = vmatprep.subr.mxu0 0.0
    %62 = vmatpush1.msra.mxu0 0.0
    %63 = vmatprep.subr.mxu0 0.0
    %64 = vmatpush1.msra.mxu0 0.0
    %65 = vmatprep.subr.mxu0 0.0
    %66 = vmatpush1.msra.mxu0 0.0
    %67 = vmatprep.subr.mxu0 0.0
    %68 = vmatpush1.msra.mxu0 0.0
    %69 = vmatprep.subr.mxu0 0.0
    %70 = vmatpush1.msra.mxu0 0.0
    %71 = vmatprep.subr.mxu0 0.0
    %72 = vmatpush1.msra.mxu0 0.0
    %73 = vmatprep.subr.mxu0 0.0
    %74 = vmatpush1.msra.mxu0 0.0
    %75 = vmatprep.subr.mxu0 0.0
    %76 = vmatpush1.msra.mxu0 0.0
    %77 = vmatprep.subr.mxu0 0.0
    %78 = vmatpush1.msra.mxu0 0.0
    %79 = vmatprep.subr.mxu0 0.0
    %80 = vmatpush1.msra.mxu0 0.0
    %81 = vmatprep.subr.mxu0 0.0
    %82 = vmatpush1.msra.mxu0 0.0
    %83 = vmatprep.subr.mxu0 0.0
    %84 = vmatpush1.msra.mxu0 0.0
    %85 = vmatprep.subr.mxu0 0.0
    %86 = vmatpush1.msra.mxu0 0.0
    %87 = vmatprep.subr.mxu0 0.0
    %88 = vmatpush1.msra.mxu0 0.0
    %89 = vmatprep.subr.mxu0 0.0
    %90 = vmatpush1.msra.mxu0 0.0
    %91 = vmatprep.subr.mxu0 0.0
    %92 = vmatpush1.msra.mxu0 0.0
    %93 = vmatprep.subr.mxu0 0.0
    %94 = vmatpush1.msra.mxu0 0.0
    %95 = vmatprep.mubr.f32.mxu0 0.0
    %96 = vmatmul.mubr.f32.gmra.mrb[0].mxu0 %v29
    %v97 = vpop.f32.mrb[0].mxu0
    %v98 = vadd.f32 %v25, %v97
    %v99 = vpop.f32.mrb[0].mxu0
    %100 = vdwg.mxu0
    %vm101 = vcmask 130048
    %102 = vst.msk [vmem:[#allocation2] sm:$0xff] %vm101, %v98
    // Predicated region
    $region14: #{tpu_custom_call.1} parent=1 // pred_check
      _
    $region15: #{tpu_custom_call.1} parent=1 // pred_check_branch
      %104 = sbr.rel (0) target = $region17
    $region16: #{tpu_custom_call.1} parent=1 // pred_region
      %s106 = ssub.s32 128, 128
      %107 = vsyncadd [#allocation3], %s106
      %s109 = sshll.u32 [#allocation2], 4
      %s110 = int_to_ptr.vmem [resolvable:$true] %s109
      %112 = dma.vmem_to_hbm [thread:$0]  %s110, 128, %s3, [#allocation3]
    $region17: #{tpu_custom_call.1} parent=1 // pred_fallthru
      _
    // Predicated region
    $region18: #{tpu_custom_call.1} parent=1 // pred_check
      _
    $region19: #{tpu_custom_call.1} parent=1 // pred_check_branch
      %114 = sbr.rel (0) target = $region21
    $region20: #{tpu_custom_call.1} parent=1 // pred_region
      %115 = dma.done [#allocation3], 128
    $region21: #{tpu_custom_call.1} parent=1 // pred_fallthru
      _
    %116 = vsyncpa [#allocation3], 1

</llo_original>
